<compile_context>
chip_gen: v7x
topology: tpu7x:2x2x1
jax: 0.10.0
libtpu: 0.0.40
codegen_flags: <defaults>
</compile_context>

<pallas_src>
import jax
import jax.numpy as jnp
from jax import lax
from jax.experimental import pallas as pl
from jax.experimental.pallas import tpu as pltpu


def basic_block_kernel(x_ref, m1e_ref, m1c_ref, b1_ref, m2_ref, b2d_ref,
                       o_ref, p_ref):
    """Whole batch per grid step (batch folded into matmul M).

    x_ref   : (B*(H+2), W*Cin) bf16  stacked row-padded, width/channel-flattened input
    m1e_ref : (2, W*Cin, W*P)  bf16  conv1 edge row taps dy in {0,2} (BN1 scale folded)
    m1c_ref : (W*Cin, 2*W*P)   bf16  conv1 center tap || 1x1 downsample (BN scales folded)
    b1_ref  : (1, W*P) f32           folded BN1 bias
    m2_ref  : (3, W*P, W*P)    bf16  conv2 banded matrices (BN2 scale folded)
    b2d_ref : (1, W*P) f32           pre-summed folded BN2 + BNd biases
    o_ref   : (B, H, W*P) f32        output (lane-dense last dim)
    p_ref   : (>=B*(H+2), W*P) f32   staging scratch in stacked-padded row layout
    """
    B, H, WP = o_ref.shape
    HP = H + 2                # padded rows per image
    R = B * HP                # stacked padded rows
    M = R - 2                 # stacked conv-output rows (valid rows + B-1 junk pairs)

    x = x_ref[...]            # (R, W*Cin) bf16

    # ---- conv1 center tap fused (along lanes) with the 1x1 downsample branch.
    wide = jnp.dot(x[1:1 + M, :], m1c_ref[...], preferred_element_type=jnp.float32)
    acc1 = wide[:, :WP]            # conv1 center-tap contribution
    ident = wide[:, WP:]           # downsample (1x1 conv * BNd scale) residual

    # ---- conv1 edge row taps (single accumulation chain -> MRB accumulate on v7x).
    acc1 = acc1 + jnp.dot(x[0:M, :], m1e_ref[0], preferred_element_type=jnp.float32)
    acc1 = acc1 + jnp.dot(x[2:2 + M, :], m1e_ref[1], preferred_element_type=jnp.float32)
    out1 = jnp.maximum(acc1 + b1_ref[...], 0.0)        # bn1 bias + relu (f32), (M, WP)

    # ---- stage out1 in f32 scratch in the stacked-padded layout (padded row p lives
    #      at scratch row p).  The junk rows of out1 land exactly on the inter-image
    #      pad positions; overwrite them (and the two end pads) with zeros AFTER the
    #      interior store so conv2's edge taps see proper zero padding.
    p_ref[1:1 + M, :] = out1
    zrow = jnp.zeros((1, WP), jnp.float32)
    p_ref[0:1, :] = zrow
    p_ref[R - 1:R, :] = zrow
    z2 = jnp.zeros((2, WP), jnp.float32)
    for b in range(B - 1):                      # inter-image pad pairs (2-row stores)
        p_ref[(b + 1) * HP - 1:(b + 1) * HP + 1, :] = z2

    # ---- conv2 (*bn2 scale): center tap straight from vregs, edge taps from scratch.
    acc2 = jnp.dot(out1.astype(jnp.bfloat16), m2_ref[1],
                   preferred_element_type=jnp.float32)
    acc2 = acc2 + jnp.dot(p_ref[0:M, :].astype(jnp.bfloat16), m2_ref[0],
                          preferred_element_type=jnp.float32)
    acc2 = acc2 + jnp.dot(p_ref[2:2 + M, :].astype(jnp.bfloat16), m2_ref[2],
                          preferred_element_type=jnp.float32)

    # ---- pre-summed biases + residual add + relu (f32), then per-image stores
    #      (the B-1 junk row pairs between images are simply not stored).
    res = jnp.maximum(acc2 + b2d_ref[...] + ident, 0.0)
    for b in range(B):
        o_ref[b] = res[b * HP:b * HP + H].astype(o_ref.dtype)


# ----------------------------- wrapper-side param prep -----------------------------
def _band3(taps, width):
    """taps: (3, Cin, Cout) f32 -> (width*Cin, width*Cout) banded matrix applying a
    3-tap, stride-1, pad-1 conv along width on a (w*Cin + c)-flattened row."""
    m = jnp.zeros((width * taps.shape[1], width * taps.shape[2]), jnp.float32)
    for dx in range(3):
        m = m + jnp.kron(jnp.eye(width, k=1 - dx, dtype=jnp.float32), taps[dx])
    return m


def prepare_params(w1, bn1, w2, bn2, wd, bnd, width, eps=1e-5):
    """Fold inference BatchNorm into the conv weights, build banded matmul operands,
    fuse the downsample 1x1 into conv1's center tap and pre-sum the bn2/bnd biases.
    Conv weights are given in PyTorch OIHW layout."""
    def fold(p):
        g, b, m, v = p
        s = g / jnp.sqrt(v + eps)
        return s, b - m * s

    s1, b1 = fold(bn1)
    s2, b2 = fold(bn2)
    sd, bd = fold(bnd)

    t1 = jnp.transpose(w1, (2, 3, 1, 0)) * s1          # (dy, dx, Cin, P), bn1 scale folded
    t2 = jnp.transpose(w2, (2, 3, 1, 0)) * s2          # (dy, dx, P,   P), bn2 scale folded
    td = jnp.transpose(wd[:, :, 0, 0], (1, 0)) * sd    # (Cin, P),          bnd scale folded

    m1_bands = [_band3(t1[dy], width) for dy in range(3)]
    md_band = jnp.kron(jnp.eye(width, dtype=jnp.float32), td)

    m1e = jnp.stack([m1_bands[0], m1_bands[2]]).astype(jnp.bfloat16)          # (2, W*Cin, W*P)
    m1c = jnp.concatenate([m1_bands[1], md_band], axis=1).astype(jnp.bfloat16)  # (W*Cin, 2*W*P)
    m2 = jnp.stack([_band3(t2[dy], width) for dy in range(3)]).astype(jnp.bfloat16)

    b1r = jnp.tile(b1, width)[None, :].astype(jnp.float32)
    b2dr = (jnp.tile(b2, width) + jnp.tile(bd, width))[None, :].astype(jnp.float32)
    return m1e, m1c, b1r, m2, b2dr


# ----------------------------- pallas_call wrappers -----------------------------
def basic_block_nhwc(x_nhwc, params):
    """NHWC-native fast path.  x: (N, H, W, Cin).  Returns (N, H, W, P) f32."""
    m1e, m1c, b1r, m2, b2dr = params
    N, H, W, Cin = x_nhwc.shape
    WP = b1r.shape[-1]
    P = WP // W
    HP = H + 2
    R = N * HP
    R_pad = ((R + 7) // 8) * 8

    # Flatten width/channel onto the lane axis, pad rows per image (width padding is
    # folded into the banded matrices), stack all images along the row axis, bf16.
    xflat = jnp.pad(x_nhwc.reshape(N, H, W * Cin), ((0, 0), (1, 1), (0, 0)))
    xflat = xflat.reshape(R, W * Cin).astype(jnp.bfloat16)

    out = pl.pallas_call(
        basic_block_kernel,
        out_shape=jax.ShapeDtypeStruct((N, H, WP), jnp.float32),
        grid=(1,),
        in_specs=[
            pl.BlockSpec((R, W * Cin), lambda s: (0, 0)),
            pl.BlockSpec((2, W * Cin, WP), lambda s: (0, 0, 0)),
            pl.BlockSpec((W * Cin, 2 * WP), lambda s: (0, 0)),
            pl.BlockSpec((1, WP), lambda s: (0, 0)),
            pl.BlockSpec((3, WP, WP), lambda s: (0, 0, 0)),
            pl.BlockSpec((1, WP), lambda s: (0, 0)),
        ],
        out_specs=pl.BlockSpec((N, H, WP), lambda s: (0, 0, 0)),
        scratch_shapes=[pltpu.VMEM((R_pad, WP), jnp.float32)],
        compiler_params=pltpu.CompilerParams(
            dimension_semantics=("parallel",),
            vmem_limit_bytes=32 * 1024 * 1024),
    )(xflat, m1e, m1c, b1r, m2, b2dr)

    return out.reshape(N, H, W, P)


def basic_block(x_nchw, params):
    """PyTorch-interface adapter (NCHW in / NCHW out).  The NHWC path above is the
    native one; keep activations NHWC across layers to avoid these transposes."""
    x = jnp.transpose(x_nchw, (0, 2, 3, 1))
    y = basic_block_nhwc(x, params)
    return jnp.transpose(y, (0, 3, 1, 2))


# ----------------------------- pure-JAX reference -----------------------------
def ref_basic_block(x, w1, bn1, w2, bn2, wd, bnd, eps=1e-5):
    def conv(x, w, pad):
        return lax.conv_general_dilated(
            x, w, (1, 1), [(pad, pad), (pad, pad)],
            dimension_numbers=('NCHW', 'OIHW', 'NCHW'))

    def bn(x, p):
        g, b, m, v = p
        s = g / jnp.sqrt(v + eps)
        return x * s[None, :, None, None] + (b - m * s)[None, :, None, None]

    out = jax.nn.relu(bn(conv(x, w1, 1), bn1))
    out = bn(conv(out, w2, 1), bn2)
    ident = bn(conv(x, wd, 0), bnd)
    return jax.nn.relu(out + ident)


if __name__ == "__main__":
    key = jax.random.PRNGKey(0)
    N, Cin, H, W = 2, 4, 16, 16
    planes = 8          # inplanes != planes -> downsample branch is active
    eps = 1e-5

    ks = jax.random.split(key, 8)
    x = jax.random.normal(ks[0], (N, Cin, H, W), jnp.float32)

    # conv weights in PyTorch OIHW layout
    w1 = 0.1 * jax.random.normal(ks[1], (planes, Cin, 3, 3), jnp.float32)
    w2 = 0.1 * jax.random.normal(ks[2], (planes, planes, 3, 3), jnp.float32)
    wd = 0.1 * jax.random.normal(ks[3], (planes, Cin, 1, 1), jnp.float32)

    def bn_params(k):
        kg, kb, km, kv = jax.random.split(k, 4)
        g = 1.0 + 0.1 * jax.random.normal(kg, (planes,), jnp.float32)
        b = 0.1 * jax.random.normal(kb, (planes,), jnp.float32)
        m = 0.1 * jax.random.normal(km, (planes,), jnp.float32)
        v = jnp.abs(jax.random.normal(kv, (planes,), jnp.float32)) + 0.5
        return g, b, m, v

    bn1 = bn_params(ks[4])
    bn2 = bn_params(ks[5])
    bnd = bn_params(ks[6])

    params = prepare_params(w1, bn1, w2, bn2, wd, bnd, width=W, eps=eps)

    out = jax.jit(basic_block)(x, params)
    out = jax.block_until_ready(out)

    ref = ref_basic_block(x, w1, bn1, w2, bn2, wd, bnd, eps=eps)
    max_err = float(jnp.max(jnp.abs(out - ref)))
    # bf16 matmul operands with f32 accumulation -> relaxed tolerance vs f32 reference
    # (intermediate is now staged in f32, so the error budget is mostly weight rounding).
    assert jnp.allclose(out, ref, atol=5e-2, rtol=5e-2), f"max abs err {max_err}"

    print("KERNEL_OK")
</pallas_src>

<mosaic_0001>
module attributes {stable_mosaic.version = 11 : i64} {
  func.func @basic_block_kernel(%arg0: i32, %arg1: memref<36x64xbf16, #tpu.memory_space<vmem>>, %arg2: memref<2x64x128xbf16, #tpu.memory_space<vmem>>, %arg3: memref<64x256xbf16, #tpu.memory_space<vmem>>, %arg4: memref<1x128xf32, #tpu.memory_space<vmem>>, %arg5: memref<3x128x128xbf16, #tpu.memory_space<vmem>>, %arg6: memref<1x128xf32, #tpu.memory_space<vmem>>, %arg7: memref<2x16x128xf32, #tpu.memory_space<vmem>>, %arg8: memref<40x128xf32, #tpu.memory_space<vmem>>) attributes {dimension_semantics = [#tpu.dimension_semantics<parallel>], iteration_bounds = array<i64: 1>, scalar_prefetch = 0 : i64, scratch_operands = 1 : i64, tpu.core_type = #tpu.core_type<tc>, window_params = [{pipeline_mode = #tpu.pipeline_mode<synchronous>, transform_indices = @transform_0, window_bounds = array<i64: 36, 64>}, {pipeline_mode = #tpu.pipeline_mode<synchronous>, transform_indices = @transform_1, window_bounds = array<i64: 2, 64, 128>}, {pipeline_mode = #tpu.pipeline_mode<synchronous>, transform_indices = @transform_2, window_bounds = array<i64: 64, 256>}, {pipeline_mode = #tpu.pipeline_mode<synchronous>, transform_indices = @transform_3, window_bounds = array<i64: 1, 128>}, {pipeline_mode = #tpu.pipeline_mode<synchronous>, transform_indices = @transform_4, window_bounds = array<i64: 3, 128, 128>}, {pipeline_mode = #tpu.pipeline_mode<synchronous>, transform_indices = @transform_5, window_bounds = array<i64: 1, 128>}, {pipeline_mode = #tpu.pipeline_mode<synchronous>, transform_indices = @transform_6, window_bounds = array<i64: 2, 16, 128>}]} {
    %c0 = arith.constant 0 : index
    %c0_0 = arith.constant 0 : index
    %0 = vector.load %arg1[%c0, %c0_0] : memref<36x64xbf16, #tpu.memory_space<vmem>>, vector<36x64xbf16>
    %1 = vector.extract_strided_slice %0 {offsets = [1, 0], sizes = [34, 64], strides = [1, 1]} : vector<36x64xbf16> to vector<34x64xbf16>
    %c0_1 = arith.constant 0 : index
    %c0_2 = arith.constant 0 : index
    %2 = vector.load %arg3[%c0_1, %c0_2] : memref<64x256xbf16, #tpu.memory_space<vmem>>, vector<64x256xbf16>
    %cst = arith.constant dense<0.000000e+00> : vector<34x256xf32>
    %3 = tpu.matmul %1, %2, %cst {dimension_numbers = #tpu.dot_dimension_numbers<[1], [0], [0], [1], [0, 0, 1, 1], [], []>} : vector<34x64xbf16>, vector<64x256xbf16>, vector<34x256xf32> -> vector<34x256xf32>
    %4 = vector.extract_strided_slice %3 {offsets = [0, 0], sizes = [34, 128], strides = [1, 1]} : vector<34x256xf32> to vector<34x128xf32>
    %5 = vector.extract_strided_slice %3 {offsets = [0, 128], sizes = [34, 128], strides = [1, 1]} : vector<34x256xf32> to vector<34x128xf32>
    %6 = vector.extract_strided_slice %0 {offsets = [0, 0], sizes = [34, 64], strides = [1, 1]} : vector<36x64xbf16> to vector<34x64xbf16>
    %c0_3 = arith.constant 0 : index
    %c0_4 = arith.constant 0 : index
    %c0_5 = arith.constant 0 : index
    %7 = vector.load %arg2[%c0_3, %c0_4, %c0_5] : memref<2x64x128xbf16, #tpu.memory_space<vmem>>, vector<1x64x128xbf16>
    %8 = vector.shape_cast %7 : vector<1x64x128xbf16> to vector<64x128xbf16>
    %cst_6 = arith.constant dense<0.000000e+00> : vector<34x128xf32>
    %9 = tpu.matmul %6, %8, %cst_6 {dimension_numbers = #tpu.dot_dimension_numbers<[1], [0], [0], [1], [0, 0, 1, 1], [], []>} : vector<34x64xbf16>, vector<64x128xbf16>, vector<34x128xf32> -> vector<34x128xf32>
    %10 = arith.addf %4, %9 : vector<34x128xf32>
    %11 = vector.extract_strided_slice %0 {offsets = [2, 0], sizes = [34, 64], strides = [1, 1]} : vector<36x64xbf16> to vector<34x64xbf16>
    %c1 = arith.constant 1 : index
    %c0_7 = arith.constant 0 : index
    %c0_8 = arith.constant 0 : index
    %12 = vector.load %arg2[%c1, %c0_7, %c0_8] : memref<2x64x128xbf16, #tpu.memory_space<vmem>>, vector<1x64x128xbf16>
    %13 = vector.shape_cast %12 : vector<1x64x128xbf16> to vector<64x128xbf16>
    %cst_9 = arith.constant dense<0.000000e+00> : vector<34x128xf32>
    %14 = tpu.matmul %11, %13, %cst_9 {dimension_numbers = #tpu.dot_dimension_numbers<[1], [0], [0], [1], [0, 0, 1, 1], [], []>} : vector<34x64xbf16>, vector<64x128xbf16>, vector<34x128xf32> -> vector<34x128xf32>
    %15 = arith.addf %10, %14 : vector<34x128xf32>
    %c0_10 = arith.constant 0 : index
    %c0_11 = arith.constant 0 : index
    %16 = vector.load %arg4[%c0_10, %c0_11] : memref<1x128xf32, #tpu.memory_space<vmem>>, vector<1x128xf32>
    %17 = vector.broadcast %16 : vector<1x128xf32> to vector<34x128xf32>
    %18 = arith.addf %15, %17 : vector<34x128xf32>
    %cst_12 = arith.constant 0.000000e+00 : f32
    %19 = vector.broadcast %cst_12 : f32 to vector<34x128xf32>
    %20 = arith.maximumf %18, %19 : vector<34x128xf32>
    %c1_13 = arith.constant 1 : index
    %c0_14 = arith.constant 0 : index
    %21 = vector.load %arg8[%c1_13, %c0_14] : memref<40x128xf32, #tpu.memory_space<vmem>>, vector<34x128xf32>
    tpu.vector_store %arg8[%c1_13, %c0_14], %20 {strides = array<i32>} : memref<40x128xf32, #tpu.memory_space<vmem>>, vector<34x128xf32>,
    %cst_15 = arith.constant 0.000000e+00 : f32
    %22 = vector.broadcast %cst_15 : f32 to vector<1x128xf32>
    %c0_16 = arith.constant 0 : index
    %c0_17 = arith.constant 0 : index
    %23 = vector.load %arg8[%c0_16, %c0_17] : memref<40x128xf32, #tpu.memory_space<vmem>>, vector<1x128xf32>
    tpu.vector_store %arg8[%c0_16, %c0_17], %22 {strides = array<i32>} : memref<40x128xf32, #tpu.memory_space<vmem>>, vector<1x128xf32>,
    %c35 = arith.constant 35 : index
    %c0_18 = arith.constant 0 : index
    %24 = vector.load %arg8[%c35, %c0_18] : memref<40x128xf32, #tpu.memory_space<vmem>>, vector<1x128xf32>
    tpu.vector_store %arg8[%c35, %c0_18], %22 {strides = array<i32>} : memref<40x128xf32, #tpu.memory_space<vmem>>, vector<1x128xf32>,
    %cst_19 = arith.constant 0.000000e+00 : f32
    %25 = vector.broadcast %cst_19 : f32 to vector<2x128xf32>
    %c17 = arith.constant 17 : index
    %c0_20 = arith.constant 0 : index
    %26 = vector.load %arg8[%c17, %c0_20] : memref<40x128xf32, #tpu.memory_space<vmem>>, vector<2x128xf32>
    tpu.vector_store %arg8[%c17, %c0_20], %25 {strides = array<i32>} : memref<40x128xf32, #tpu.memory_space<vmem>>, vector<2x128xf32>,
    %27 = arith.truncf %20 : vector<34x128xf32> to vector<34x128xbf16>
    %c1_21 = arith.constant 1 : index
    %c0_22 = arith.constant 0 : index
    %c0_23 = arith.constant 0 : index
    %28 = vector.load %arg5[%c1_21, %c0_22, %c0_23] : memref<3x128x128xbf16, #tpu.memory_space<vmem>>, vector<1x128x128xbf16>
    %29 = vector.shape_cast %28 : vector<1x128x128xbf16> to vector<128x128xbf16>
    %cst_24 = arith.constant dense<0.000000e+00> : vector<34x128xf32>
    %30 = tpu.matmul %27, %29, %cst_24 {dimension_numbers = #tpu.dot_dimension_numbers<[1], [0], [0], [1], [0, 0, 1, 1], [], []>} : vector<34x128xbf16>, vector<128x128xbf16>, vector<34x128xf32> -> vector<34x128xf32>
    %c0_25 = arith.constant 0 : index
    %c0_26 = arith.constant 0 : index
    %31 = vector.load %arg8[%c0_25, %c0_26] : memref<40x128xf32, #tpu.memory_space<vmem>>, vector<34x128xf32>
    %32 = arith.truncf %31 : vector<34x128xf32> to vector<34x128xbf16>
    %c0_27 = arith.constant 0 : index
    %c0_28 = arith.constant 0 : index
    %c0_29 = arith.constant 0 : index
    %33 = vector.load %arg5[%c0_27, %c0_28, %c0_29] : memref<3x128x128xbf16, #tpu.memory_space<vmem>>, vector<1x128x128xbf16>
    %34 = vector.shape_cast %33 : vector<1x128x128xbf16> to vector<128x128xbf16>
    %cst_30 = arith.constant dense<0.000000e+00> : vector<34x128xf32>
    %35 = tpu.matmul %32, %34, %cst_30 {dimension_numbers = #tpu.dot_dimension_numbers<[1], [0], [0], [1], [0, 0, 1, 1], [], []>} : vector<34x128xbf16>, vector<128x128xbf16>, vector<34x128xf32> -> vector<34x128xf32>
    %36 = arith.addf %30, %35 : vector<34x128xf32>
    %c2 = arith.constant 2 : index
    %c0_31 = arith.constant 0 : index
    %37 = vector.load %arg8[%c2, %c0_31] : memref<40x128xf32, #tpu.memory_space<vmem>>, vector<34x128xf32>
    %38 = arith.truncf %37 : vector<34x128xf32> to vector<34x128xbf16>
    %c2_32 = arith.constant 2 : index
    %c0_33 = arith.constant 0 : index
    %c0_34 = arith.constant 0 : index
    %39 = vector.load %arg5[%c2_32, %c0_33, %c0_34] : memref<3x128x128xbf16, #tpu.memory_space<vmem>>, vector<1x128x128xbf16>
    %40 = vector.shape_cast %39 : vector<1x128x128xbf16> to vector<128x128xbf16>
    %cst_35 = arith.constant dense<0.000000e+00> : vector<34x128xf32>
    %41 = tpu.matmul %38, %40, %cst_35 {dimension_numbers = #tpu.dot_dimension_numbers<[1], [0], [0], [1], [0, 0, 1, 1], [], []>} : vector<34x128xbf16>, vector<128x128xbf16>, vector<34x128xf32> -> vector<34x128xf32>
    %42 = arith.addf %36, %41 : vector<34x128xf32>
    %c0_36 = arith.constant 0 : index
    %c0_37 = arith.constant 0 : index
    %43 = vector.load %arg6[%c0_36, %c0_37] : memref<1x128xf32, #tpu.memory_space<vmem>>, vector<1x128xf32>
    %44 = vector.broadcast %43 : vector<1x128xf32> to vector<34x128xf32>
    %45 = arith.addf %42, %44 : vector<34x128xf32>
    %46 = arith.addf %45, %5 : vector<34x128xf32>
    %cst_38 = arith.constant 0.000000e+00 : f32
    %47 = vector.broadcast %cst_38 : f32 to vector<34x128xf32>
    %48 = arith.maximumf %46, %47 : vector<34x128xf32>
    %49 = vector.extract_strided_slice %48 {offsets = [0, 0], sizes = [16, 128], strides = [1, 1]} : vector<34x128xf32> to vector<16x128xf32>
    %c0_39 = arith.constant 0 : index
    %c0_40 = arith.constant 0 : index
    %c0_41 = arith.constant 0 : index
    %50 = vector.load %arg7[%c0_39, %c0_40, %c0_41] : memref<2x16x128xf32, #tpu.memory_space<vmem>>, vector<1x16x128xf32>
    %51 = vector.shape_cast %50 : vector<1x16x128xf32> to vector<16x128xf32>
    %52 = vector.shape_cast %49 : vector<16x128xf32> to vector<1x16x128xf32>
    tpu.vector_store %arg7[%c0_39, %c0_40, %c0_41], %52 {strides = array<i32>} : memref<2x16x128xf32, #tpu.memory_space<vmem>>, vector<1x16x128xf32>,
    %53 = vector.extract_strided_slice %48 {offsets = [18, 0], sizes = [16, 128], strides = [1, 1]} : vector<34x128xf32> to vector<16x128xf32>
    %c1_42 = arith.constant 1 : index
    %c0_43 = arith.constant 0 : index
    %c0_44 = arith.constant 0 : index
    %54 = vector.load %arg7[%c1_42, %c0_43, %c0_44] : memref<2x16x128xf32, #tpu.memory_space<vmem>>, vector<1x16x128xf32>
    %55 = vector.shape_cast %54 : vector<1x16x128xf32> to vector<16x128xf32>
    %56 = vector.shape_cast %53 : vector<16x128xf32> to vector<1x16x128xf32>
    tpu.vector_store %arg7[%c1_42, %c0_43, %c0_44], %56 {strides = array<i32>} : memref<2x16x128xf32, #tpu.memory_space<vmem>>, vector<1x16x128xf32>,
    return
  }
  func.func @transform_0(%arg0: i32) -> (i32, i32) {
    %c0_i32 = arith.constant 0 : i32
    %c0_i32_0 = arith.constant 0 : i32
    %c0_i32_1 = arith.constant 0 : i32
    return %c0_i32, %c0_i32_0 : i32, i32
  }
  func.func @transform_1(%arg0: i32) -> (i32, i32, i32) {
    %c0_i32 = arith.constant 0 : i32
    %c0_i32_0 = arith.constant 0 : i32
    %c0_i32_1 = arith.constant 0 : i32
    %c0_i32_2 = arith.constant 0 : i32
    return %c0_i32, %c0_i32_0, %c0_i32_1 : i32, i32, i32
  }
  func.func @transform_2(%arg0: i32) -> (i32, i32) {
    %c0_i32 = arith.constant 0 : i32
    %c0_i32_0 = arith.constant 0 : i32
    %c0_i32_1 = arith.constant 0 : i32
    return %c0_i32, %c0_i32_0 : i32, i32
  }
  func.func @transform_3(%arg0: i32) -> (i32, i32) {
    %c0_i32 = arith.constant 0 : i32
    %c0_i32_0 = arith.constant 0 : i32
    %c0_i32_1 = arith.constant 0 : i32
    return %c0_i32, %c0_i32_0 : i32, i32
  }
  func.func @transform_4(%arg0: i32) -> (i32, i32, i32) {
    %c0_i32 = arith.constant 0 : i32
    %c0_i32_0 = arith.constant 0 : i32
    %c0_i32_1 = arith.constant 0 : i32
    %c0_i32_2 = arith.constant 0 : i32
    return %c0_i32, %c0_i32_0, %c0_i32_1 : i32, i32, i32
  }
  func.func @transform_5(%arg0: i32) -> (i32, i32) {
    %c0_i32 = arith.constant 0 : i32
    %c0_i32_0 = arith.constant 0 : i32
    %c0_i32_1 = arith.constant 0 : i32
    return %c0_i32, %c0_i32_0 : i32, i32
  }
  func.func @transform_6(%arg0: i32) -> (i32, i32, i32) {
    %c0_i32 = arith.constant 0 : i32
    %c0_i32_0 = arith.constant 0 : i32
    %c0_i32_1 = arith.constant 0 : i32
    %c0_i32_2 = arith.constant 0 : i32
    return %c0_i32, %c0_i32_0, %c0_i32_1 : i32, i32, i32
  }
}

</mosaic_0001>

<llo_original>
// kernel: basic_block.1
$region0: #{basic_block.1}
  #allocation0 [shape = 'u32[]', space=smem, size = 0x4, offset = 0x4, fixed_abs, tag = 'smem constant byte address 0x4 - core index']
  #allocation1 [shape = 'u32[144,128]{1,0:T(1,128)}', space=vmem, size = 0x12000, scoped, tag = 'internal scratch']
  #allocation2 [shape = 'f32[40,128]{1,0:T(8,128)}', space=vmem, size = 0x5000, scoped, tag = 'scratch operand']
  %s0 = inlined_call_operand.vmem [shape: bf16[36,64], index: 0, kind: input, shape index: {}]
  %s1 = inlined_call_operand.vmem [shape: bf16[2,64,128], index: 1, kind: input, shape index: {}]
  %s2 = inlined_call_operand.vmem [shape: bf16[64,256], index: 2, kind: input, shape index: {}]
  %s3 = inlined_call_operand.vmem [shape: f32[1,128], index: 3, kind: input, shape index: {}]
  %s4 = inlined_call_operand.vmem [shape: bf16[3,128,128], index: 4, kind: input, shape index: {}]
  %s5 = inlined_call_operand.vmem [shape: f32[1,128], index: 5, kind: input, shape index: {}]
  %s6 = inlined_call_operand.vmem [shape: f32[2,16,128], index: 6, kind: output, shape index: {}]
  %s7 = sld [smem:[#allocation0]]
  $region34: #{basic_block.1} parent=0
    _
  %s9 = ssub.s32 1, %s7
  %s10 = scalar_select 0, %s9, %s7
  // Predicated region
  $region2: #{basic_block.1} parent=0 // pred_check
    _
  $region3: #{basic_block.1} parent=0 // pred_check_branch
    %12 = sbr.rel (0) target = $region5
  $region4: #{basic_block.1} parent=0 // pred_region
    _
  $region5: #{basic_block.1} parent=0 // pred_fallthru
    _
  // Predicated region
  $region6: #{basic_block.1} parent=0 // pred_check
    _
  $region7: #{basic_block.1} parent=0 // pred_check_branch
    %14 = sbr.rel (0) target = $region9
  $region8: #{basic_block.1} parent=0 // pred_region
    _
  $region9: #{basic_block.1} parent=0 // pred_fallthru
    _
  // Predicated region
  $region10: #{basic_block.1} parent=0 // pred_check
    _
  $region11: #{basic_block.1} parent=0 // pred_check_branch
    %16 = sbr.rel (0) target = $region13
  $region12: #{basic_block.1} parent=0 // pred_region
    _
  $region13: #{basic_block.1} parent=0 // pred_fallthru
    _
  // Predicated region
  $region14: #{basic_block.1} parent=0 // pred_check
    _
  $region15: #{basic_block.1} parent=0 // pred_check_branch
    %18 = sbr.rel (0) target = $region17
  $region16: #{basic_block.1} parent=0 // pred_region
    _
  $region17: #{basic_block.1} parent=0 // pred_fallthru
    _
  // Predicated region
  $region18: #{basic_block.1} parent=0 // pred_check
    _
  $region19: #{basic_block.1} parent=0 // pred_check_branch
    %20 = sbr.rel (0) target = $region21
  $region20: #{basic_block.1} parent=0 // pred_region
    _
  $region21: #{basic_block.1} parent=0 // pred_fallthru
    _
  // Predicated region
  $region22: #{basic_block.1} parent=0 // pred_check
    _
  $region23: #{basic_block.1} parent=0 // pred_check_branch
    %22 = sbr.rel (0) target = $region25
  $region24: #{basic_block.1} parent=0 // pred_region
    _
  $region25: #{basic_block.1} parent=0 // pred_fallthru
    _
  %v24 = vld [vmem:[%s0] sm:$0xf]
  %v25 = vld [vmem:[%s0 + $0x4] sm:$0xf]
  %v26 = vld [vmem:[%s0 + $0x8] sm:$0xf]
  %v27 = vld [vmem:[%s0 + $0xc] sm:$0xf]
  %v28 = vld [vmem:[%s0 + $0x10] sm:$0x3]
  %v29 = vld [vmem:[%s2] sm:$0xff]
  %v30 = vld [vmem:[%s2 + $0x8] sm:$0xff]
  %v31 = vld [vmem:[%s2 + $0x10] sm:$0xff]
  %v32 = vld [vmem:[%s2 + $0x18] sm:$0xff]
  %v33 = vld [vmem:[%s2 + $0x20] sm:$0xff]
  %v34 = vld [vmem:[%s2 + $0x28] sm:$0xff]
  %v35 = vld [vmem:[%s2 + $0x30] sm:$0xff]
  %v36 = vld [vmem:[%s2 + $0x38] sm:$0xff]
  %v42 = vunpack.c.l.b16 %v24
  %v43 = vunpack.c.l.b16 %v25
  %v44 = vunpack.c.l.b16 %v26
  %v45 = vunpack.c.l.b16 %v27
  %v46 = vunpack.c.l.b16 %v28
  %v47 = vpack.c.b16 %v43, %v42
  %v48 = vpack.c.b16 %v45, %v44
  %v49 = vpack.c.b16 %v46, %v46
  %vm50 = vsmask.f32 7424
  %v52 = vshrl.u32 %v47, 16
  %v54 = vshll.u32 %v47, 16
  %v56 = vrot.slane %v54, 1
  %v57 = vor.u32 %v52, %v56
  %v59 = vshll.u32 %v48, 16
  %v61 = vrot.slane %v59, 1
  %v62 = vsel %vm50, %v57, %v61
  %v63 = vshrl.u32 %v48, 16
  %v65 = vor.u32 %v63, %v61
  %v67 = vshll.u32 %v49, 16
  %v69 = vrot.slane %v67, 1
  %v70 = vsel %vm50, %v65, %v69
  %v71 = vshrl.u32 %v49, 16
  %v73 = vor.u32 %v71, %v69
  %v82 = vunpack.c.l.b16 %v29
  %v83 = vunpack.c.h.b16 %v29
  %v84 = vunpack.c.l.b16 %v30
  %v85 = vunpack.c.h.b16 %v30
  %v86 = vunpack.c.l.b16 %v31
  %v87 = vunpack.c.h.b16 %v31
  %v88 = vunpack.c.l.b16 %v32
  %v89 = vunpack.c.h.b16 %v32
  %v90 = vunpack.c.l.b16 %v33
  %v91 = vunpack.c.h.b16 %v33
  %v92 = vunpack.c.l.b16 %v34
  %v93 = vunpack.c.h.b16 %v34
  %v94 = vunpack.c.l.b16 %v35
  %v95 = vunpack.c.h.b16 %v35
  %v96 = vunpack.c.l.b16 %v36
  %v97 = vunpack.c.h.b16 %v36
  %v98 = vpack.c.b16 %v84, %v82
  %v99 = vpack.c.b16 %v85, %v83
  %v100 = vpack.c.b16 %v88, %v86
  %v101 = vpack.c.b16 %v89, %v87
  %v102 = vpack.c.b16 %v92, %v90
  %v103 = vpack.c.b16 %v93, %v91
  %v104 = vpack.c.b16 %v96, %v94
  %v105 = vpack.c.b16 %v97, %v95
  %vm114 = vcmask 523264
  %v116 = vsel %vm114, %v62, 0
  %v119 = vsel %vm114, %v70, 0
  %v122 = vsel %vm114, %v73, 0
  %124 = vmatprep.subr.bf16.mxu0 %v99
  %125 = vmatpush1.bf16.msra.mxu0 %v98
  %126 = vmatprep.subr.bf16.mxu0 %v101
  %127 = vmatpush1.bf16.msra.mxu0 %v100
  %128 = vmatprep.subr.bf16.mxu0 %v103
  %129 = vmatpush1.bf16.msra.mxu0 %v102
  %130 = vmatprep.subr.bf16.mxu0 %v105
  %131 = vmatpush1.bf16.msra.mxu0 %v104
  %132 = vmatprep.subr.bf16.mxu0 0
  %133 = vmatpush1.bf16.msra.mxu0 0
  %134 = vmatprep.subr.bf16.mxu0 0
  %135 = vmatpush1.bf16.msra.mxu0 0
  %136 = vmatprep.subr.bf16.mxu0 0
  %137 = vmatpush1.bf16.msra.mxu0 0
  %138 = vmatprep.subr.bf16.mxu0 0
  %139 = vmatpush1.bf16.msra.mxu0 0
  %140 = vmatprep.subr.bf16.mxu0 0
  %141 = vmatpush1.bf16.msra.mxu0 0
  %142 = vmatprep.subr.bf16.mxu0 0
  %143 = vmatpush1.bf16.msra.mxu0 0
  %144 = vmatprep.subr.bf16.mxu0 0
  %145 = vmatpush1.bf16.msra.mxu0 0
  %146 = vmatprep.subr.bf16.mxu0 0
  %147 = vmatpush1.bf16.msra.mxu0 0
  %148 = vmatprep.subr.bf16.mxu0 0
  %149 = vmatpush1.bf16.msra.mxu0 0
  %150 = vmatprep.subr.bf16.mxu0 0
  %151 = vmatpush1.bf16.msra.mxu0 0
  %152 = vmatprep.subr.bf16.mxu0 0
  %153 = vmatpush1.bf16.msra.mxu0 0
  %154 = vmatprep.subr.bf16.mxu0 0
  %155 = vmatpush1.bf16.msra.mxu0 0
  %156 = vmatprep.mubr.bf16.mxu0 0
  %157 = vmatmul.mubr.bf16.gmra.mrb[0].mxu0 %v116
  %v158 = vpop.f32.mrb[0].mxu0
  %v159 = vadd.f32 0.0, %v158
  %v160 = vpop.f32.mrb[0].mxu0
  %v161 = vadd.f32 0.0, %v160
  %v162 = vpop.f32.mrb[0].mxu0
  %v163 = vadd.f32 0.0, %v162
  %v164 = vpop.f32.mrb[0].mxu0
  %v165 = vadd.f32 0.0, %v164
  %166 = vmatprep.mubr.bf16.mxu0 0
  %167 = vmatmul.mubr.bf16.gmra.mrb[0].mxu0 %v119
  %v168 = vpop.f32.mrb[0].mxu0
  %v169 = vadd.f32 0.0, %v168
  %v170 = vpop.f32.mrb[0].mxu0
  %v171 = vadd.f32 0.0, %v170
  %v172 = vpop.f32.mrb[0].mxu0
  %v173 = vadd.f32 0.0, %v172
  %v174 = vpop.f32.mrb[0].mxu0
  %v175 = vadd.f32 0.0, %v174
  %176 = vmatprep.mubr.bf16.mxu0 0
  %177 = vmatmul.mubr.bf16.gmra.mrb[0].mxu0 %v122
  %v178 = vpop.f32.mrb[0].mxu0
  %v179 = vadd.f32 0.0, %v178
  %v180 = vpop.f32.mrb[0].mxu0
  %v181 = vadd.f32 0.0, %v180
  %v182 = vpop.f32.mrb[0].mxu0
  %v183 = vpop.f32.mrb[0].mxu0
  %184 = vdwg.mxu0
  %v185 = vld [vmem:[%s1] sm:$0xf]
  %v186 = vld [vmem:[%s1 + $0x4] sm:$0xf]
  %v187 = vld [vmem:[%s1 + $0x8] sm:$0xf]
  %v188 = vld [vmem:[%s1 + $0xc] sm:$0xf]
  %v189 = vld [vmem:[%s1 + $0x10] sm:$0xf]
  %v190 = vld [vmem:[%s1 + $0x14] sm:$0xf]
  %v191 = vld [vmem:[%s1 + $0x18] sm:$0xf]
  %v192 = vld [vmem:[%s1 + $0x1c] sm:$0xf]
  %v201 = vunpack.c.l.b16 %v185
  %v202 = vunpack.c.l.b16 %v186
  %v203 = vunpack.c.l.b16 %v187
  %v204 = vunpack.c.l.b16 %v188
  %v205 = vunpack.c.l.b16 %v189
  %v206 = vunpack.c.l.b16 %v190
  %v207 = vunpack.c.l.b16 %v191
  %v208 = vunpack.c.l.b16 %v192
  %v209 = vpack.c.b16 %v202, %v201
  %v210 = vpack.c.b16 %v204, %v203
  %v211 = vpack.c.b16 %v206, %v205
  %v212 = vpack.c.b16 %v208, %v207
  %v217 = vsel %vm114, %v47, 0
  %v219 = vsel %vm114, %v48, 0
  %v221 = vsel %vm114, %v49, 0
  %223 = vmatprep.subr.bf16.mxu0 0
  %224 = vmatpush1.bf16.msra.mxu0 %v209
  %225 = vmatprep.subr.bf16.mxu0 0
  %226 = vmatpush1.bf16.msra.mxu0 %v210
  %227 = vmatprep.subr.bf16.mxu0 0
  %228 = vmatpush1.bf16.msra.mxu0 %v211
  %229 = vmatprep.subr.bf16.mxu0 0
  %230 = vmatpush1.bf16.msra.mxu0 %v212
  %231 = vmatprep.subr.bf16.mxu0 0
  %232 = vmatpush1.bf16.msra.mxu0 0
  %233 = vmatprep.subr.bf16.mxu0 0
  %234 = vmatpush1.bf16.msra.mxu0 0
  %235 = vmatprep.subr.bf16.mxu0 0
  %236 = vmatpush1.bf16.msra.mxu0 0
  %237 = vmatprep.subr.bf16.mxu0 0
  %238 = vmatpush1.bf16.msra.mxu0 0
  %239 = vmatprep.subr.bf16.mxu0 0
  %240 = vmatpush1.bf16.msra.mxu0 0
  %241 = vmatprep.subr.bf16.mxu0 0
  %242 = vmatpush1.bf16.msra.mxu0 0
  %243 = vmatprep.subr.bf16.mxu0 0
  %244 = vmatpush1.bf16.msra.mxu0 0
  %245 = vmatprep.subr.bf16.mxu0 0
  %246 = vmatpush1.bf16.msra.mxu0 0
  %247 = vmatprep.subr.bf16.mxu0 0
  %248 = vmatpush1.bf16.msra.mxu0 0
  %249 = vmatprep.subr.bf16.mxu0 0
  %250 = vmatpush1.bf16.msra.mxu0 0
  %251 = vmatprep.subr.bf16.mxu0 0
  %252 = vmatpush1.bf16.msra.mxu0 0
  %253 = vmatprep.subr.bf16.mxu0 0
  %254 = vmatpush1.bf16.msra.mxu0 0
  %255 = vmatprep.mubr.bf16.mxu0 0
  %256 = vmatmul.mubr.bf16.gmra.mrb[0].mxu0 %v217
  %v257 = vpop.f32.mrb[0].mxu0
  %v258 = vadd.f32 0.0, %v257
  %v259 = vpop.f32.mrb[0].mxu0
  %v260 = vpop.f32.mrb[0].mxu0
  %v261 = vadd.f32 0.0, %v260
  %v262 = vpop.f32.mrb[0].mxu0
  %263 = vmatprep.mubr.bf16.mxu0 0
  %264 = vmatmul.mubr.bf16.gmra.mrb[0].mxu0 %v219
  %v265 = vpop.f32.mrb[0].mxu0
  %v266 = vadd.f32 0.0, %v265
  %v267 = vpop.f32.mrb[0].mxu0
  %v268 = vpop.f32.mrb[0].mxu0
  %v269 = vadd.f32 0.0, %v268
  %v270 = vpop.f32.mrb[0].mxu0
  %271 = vmatprep.mubr.bf16.mxu0 0
  %272 = vmatmul.mubr.bf16.gmra.mrb[0].mxu0 %v221
  %v273 = vpop.f32.mrb[0].mxu0
  %v274 = vadd.f32 0.0, %v273
  %v275 = vpop.f32.mrb[0].mxu0
  %v276 = vpop.f32.mrb[0].mxu0
  %v277 = vpop.f32.mrb[0].mxu0
  %278 = vdwg.mxu0
  %v279 = vadd.f32 %v159, %v258
  %v280 = vadd.f32 %v163, %v261
  %v281 = vadd.f32 %v169, %v266
  %v282 = vadd.f32 %v173, %v269
  %v283 = vadd.f32 %v179, %v274
  %s284 = scalar_lea.vmem %s1, 32
  %v285 = vld [vmem:[%s284] sm:$0xf]
  %v286 = vld [vmem:[%s284 + $0x4] sm:$0xf]
  %v287 = vld [vmem:[%s284 + $0x8] sm:$0xf]
  %v288 = vld [vmem:[%s284 + $0xc] sm:$0xf]
  %v289 = vld [vmem:[%s284 + $0x10] sm:$0xf]
  %v290 = vld [vmem:[%s284 + $0x14] sm:$0xf]
  %v291 = vld [vmem:[%s284 + $0x18] sm:$0xf]
  %v292 = vld [vmem:[%s284 + $0x1c] sm:$0xf]
  %vm293 = vcmask 1046528
  %v294 = vrot.slane %v47, 1
  %v295 = vrot.slane %v48, 1
  %v296 = vsel %vm293, %v294, %v295
  %v297 = vrot.slane %v49, 1
  %v298 = vsel %vm293, %v295, %v297
  %v307 = vunpack.c.l.b16 %v285
  %v308 = vunpack.c.l.b16 %v286
  %v309 = vunpack.c.l.b16 %v287
  %v310 = vunpack.c.l.b16 %v288
  %v311 = vunpack.c.l.b16 %v289
  %v312 = vunpack.c.l.b16 %v290
  %v313 = vunpack.c.l.b16 %v291
  %v314 = vunpack.c.l.b16 %v292
  %v315 = vpack.c.b16 %v308, %v307
  %v316 = vpack.c.b16 %v310, %v309
  %v317 = vpack.c.b16 %v312, %v311
  %v318 = vpack.c.b16 %v314, %v313
  %v324 = vsel %vm114, %v296, 0
  %v327 = vsel %vm114, %v298, 0
  %v330 = vsel %vm114, %v297, 0
  %332 = vmatprep.subr.bf16.mxu0 0
  %333 = vmatpush1.bf16.msra.mxu0 %v315
  %334 = vmatprep.subr.bf16.mxu0 0
  %335 = vmatpush1.bf16.msra.mxu0 %v316
  %336 = vmatprep.subr.bf16.mxu0 0
  %337 = vmatpush1.bf16.msra.mxu0 %v317
  %338 = vmatprep.subr.bf16.mxu0 0
  %339 = vmatpush1.bf16.msra.mxu0 %v318
  %340 = vmatprep.subr.bf16.mxu0 0
  %341 = vmatpush1.bf16.msra.mxu0 0
  %342 = vmatprep.subr.bf16.mxu0 0
  %343 = vmatpush1.bf16.msra.mxu0 0
  %344 = vmatprep.subr.bf16.mxu0 0
  %345 = vmatpush1.bf16.msra.mxu0 0
  %346 = vmatprep.subr.bf16.mxu0 0
  %347 = vmatpush1.bf16.msra.mxu0 0
  %348 = vmatprep.subr.bf16.mxu0 0
  %349 = vmatpush1.bf16.msra.mxu0 0
  %350 = vmatprep.subr.bf16.mxu0 0
  %351 = vmatpush1.bf16.msra.mxu0 0
  %352 = vmatprep.subr.bf16.mxu0 0
  %353 = vmatpush1.bf16.msra.mxu0 0
  %354 = vmatprep.subr.bf16.mxu0 0
  %355 = vmatpush1.bf16.msra.mxu0 0
  %356 = vmatprep.subr.bf16.mxu0 0
  %357 = vmatpush1.bf16.msra.mxu0 0
  %358 = vmatprep.subr.bf16.mxu0 0
  %359 = vmatpush1.bf16.msra.mxu0 0
  %360 = vmatprep.subr.bf16.mxu0 0
  %361 = vmatpush1.bf16.msra.mxu0 0
  %362 = vmatprep.subr.bf16.mxu0 0
  %363 = vmatpush1.bf16.msra.mxu0 0
  %364 = vmatprep.mubr.bf16.mxu0 0
  %365 = vmatmul.mubr.bf16.gmra.mrb[0].mxu0 %v324
  %v366 = vpop.f32.mrb[0].mxu0
  %v367 = vadd.f32 0.0, %v366
  %v368 = vpop.f32.mrb[0].mxu0
  %v369 = vpop.f32.mrb[0].mxu0
  %v370 = vadd.f32 0.0, %v369
  %v371 = vpop.f32.mrb[0].mxu0
  %372 = vmatprep.mubr.bf16.mxu0 0
  %373 = vmatmul.mubr.bf16.gmra.mrb[0].mxu0 %v327
  %v374 = vpop.f32.mrb[0].mxu0
  %v375 = vadd.f32 0.0, %v374
  %v376 = vpop.f32.mrb[0].mxu0
  %v377 = vpop.f32.mrb[0].mxu0
  %v378 = vadd.f32 0.0, %v377
  %v379 = vpop.f32.mrb[0].mxu0
  %380 = vmatprep.mubr.bf16.mxu0 0
  %381 = vmatmul.mubr.bf16.gmra.mrb[0].mxu0 %v330
  %v382 = vpop.f32.mrb[0].mxu0
  %v383 = vadd.f32 0.0, %v382
  %v384 = vpop.f32.mrb[0].mxu0
  %v385 = vpop.f32.mrb[0].mxu0
  %v386 = vpop.f32.mrb[0].mxu0
  %387 = vdwg.mxu0
  %v388 = vadd.f32 %v279, %v367
  %v389 = vadd.f32 %v280, %v370
  %v390 = vadd.f32 %v281, %v375
  %v391 = vadd.f32 %v282, %v378
  %v392 = vadd.f32 %v283, %v383
  %v393 = vld [vmem:[%s3] sm:$0x1]
  %v395 = vlaneseq
  %v396 = vshrl.u32 %v395, 7
  %v397 = vsub.s32 0, %v396
  %v398 = vrot.slane %v393, %v397
  %v400 = vadd.f32 %v388, %v398
  %v401 = vadd.f32 %v389, %v398
  %v402 = vadd.f32 %v390, %v398
  %v403 = vadd.f32 %v391, %v398
  %v404 = vadd.f32 %v392, %v398
  %v405 = vmax.f32 %v400, 0.0
  %v406 = vmax.f32 %v401, 0.0
  %v407 = vmax.f32 %v402, 0.0
  %v408 = vmax.f32 %v403, 0.0
  %v409 = vmax.f32 %v404, 0.0
  %410 = vst [vmem:[#allocation2 + $0x1] sm:$0xff] %v405
  %411 = vst [vmem:[#allocation2 + $0x9] sm:$0xff] %v406
  %412 = vst [vmem:[#allocation2 + $0x11] sm:$0xff] %v407
  %413 = vst [vmem:[#allocation2 + $0x19] sm:$0xff] %v408
  %414 = vst [vmem:[#allocation2 + $0x21] sm:$0x3] %v409
  %415 = vst [vmem:[#allocation2] sm:$0x1] 0.0
  %416 = vst [vmem:[#allocation2 + $0x23] sm:$0x1] 0.0
  %417 = vst [vmem:[#allocation2 + $0x11] sm:$0x3] 0.0
  %v418 = vpack.c.bf16 %v406, %v405
  %v419 = vpack.c.bf16 %v408, %v407
  %v420 = vpack.c.bf16 %v409, %v409
  %s421 = scalar_lea.vmem %s4, 64
  %v422 = vld [vmem:[%s421] sm:$0xf]
  %v423 = vld [vmem:[%s421 + $0x4] sm:$0xf]
  %v424 = vld [vmem:[%s421 + $0x8] sm:$0xf]
  %v425 = vld [vmem:[%s421 + $0xc] sm:$0xf]
  %v426 = vld [vmem:[%s421 + $0x10] sm:$0xf]
  %v427 = vld [vmem:[%s421 + $0x14] sm:$0xf]
  %v428 = vld [vmem:[%s421 + $0x18] sm:$0xf]
  %v429 = vld [vmem:[%s421 + $0x1c] sm:$0xf]
  %v430 = vld [vmem:[%s421 + $0x20] sm:$0xf]
  %v431 = vld [vmem:[%s421 + $0x24] sm:$0xf]
  %v432 = vld [vmem:[%s421 + $0x28] sm:$0xf]
  %v433 = vld [vmem:[%s421 + $0x2c] sm:$0xf]
  %v434 = vld [vmem:[%s421 + $0x30] sm:$0xf]
  %v435 = vld [vmem:[%s421 + $0x34] sm:$0xf]
  %v436 = vld [vmem:[%s421 + $0x38] sm:$0xf]
  %v437 = vld [vmem:[%s421 + $0x3c] sm:$0xf]
  %v438 = vld [vmem:[#allocation2] sm:$0xff]
  %v439 = vld [vmem:[#allocation2 + $0x8] sm:$0xff]
  %v440 = vld [vmem:[#allocation2 + $0x10] sm:$0xff]
  %v441 = vld [vmem:[#allocation2 + $0x18] sm:$0xff]
  %v442 = vld [vmem:[#allocation2 + $0x20] sm:$0x3]
  %v443 = vpack.c.bf16 %v439, %v438
  %v444 = vpack.c.bf16 %v441, %v440
  %v445 = vpack.c.bf16 %v442, %v442
  %v446 = vld [vmem:[%s4] sm:$0xf]
  %v447 = vld [vmem:[%s4 + $0x4] sm:$0xf]
  %v448 = vld [vmem:[%s4 + $0x8] sm:$0xf]
  %v449 = vld [vmem:[%s4 + $0xc] sm:$0xf]
  %v450 = vld [vmem:[%s4 + $0x10] sm:$0xf]
  %v451 = vld [vmem:[%s4 + $0x14] sm:$0xf]
  %v452 = vld [vmem:[%s4 + $0x18] sm:$0xf]
  %v453 = vld [vmem:[%s4 + $0x1c] sm:$0xf]
  %v454 = vld [vmem:[%s4 + $0x20] sm:$0xf]
  %v455 = vld [vmem:[%s4 + $0x24] sm:$0xf]
  %v456 = vld [vmem:[%s4 + $0x28] sm:$0xf]
  %v457 = vld [vmem:[%s4 + $0x2c] sm:$0xf]
  %v458 = vld [vmem:[%s4 + $0x30] sm:$0xf]
  %v459 = vld [vmem:[%s4 + $0x34] sm:$0xf]
  %v460 = vld [vmem:[%s4 + $0x38] sm:$0xf]
  %v461 = vld [vmem:[%s4 + $0x3c] sm:$0xf]
  %v478 = vunpack.c.l.b16 %v446
  %v479 = vunpack.c.l.b16 %v447
  %v480 = vunpack.c.l.b16 %v448
  %v481 = vunpack.c.l.b16 %v449
  %v482 = vunpack.c.l.b16 %v450
  %v483 = vunpack.c.l.b16 %v451
  %v484 = vunpack.c.l.b16 %v452
  %v485 = vunpack.c.l.b16 %v453
  %v486 = vunpack.c.l.b16 %v454
  %v487 = vunpack.c.l.b16 %v455
  %v488 = vunpack.c.l.b16 %v456
  %v489 = vunpack.c.l.b16 %v457
  %v490 = vunpack.c.l.b16 %v458
  %v491 = vunpack.c.l.b16 %v459
  %v492 = vunpack.c.l.b16 %v460
  %v493 = vunpack.c.l.b16 %v461
  %v494 = vpack.c.b16 %v479, %v478
  %v495 = vpack.c.b16 %v481, %v480
  %v496 = vpack.c.b16 %v483, %v482
  %v497 = vpack.c.b16 %v485, %v484
  %v498 = vpack.c.b16 %v487, %v486
  %v499 = vpack.c.b16 %v489, %v488
  %v500 = vpack.c.b16 %v491, %v490
  %v501 = vpack.c.b16 %v493, %v492
  %510 = vmatprep.subr.bf16.mxu0 0
  %511 = vmatpush1.bf16.msra.mxu0 %v494
  %512 = vmatprep.subr.bf16.mxu0 0
  %513 = vmatpush1.bf16.msra.mxu0 %v495
  %514 = vmatprep.subr.bf16.mxu0 0
  %515 = vmatpush1.bf16.msra.mxu0 %v496
  %516 = vmatprep.subr.bf16.mxu0 0
  %517 = vmatpush1.bf16.msra.mxu0 %v497
  %518 = vmatprep.subr.bf16.mxu0 0
  %519 = vmatpush1.bf16.msra.mxu0 %v498
  %520 = vmatprep.subr.bf16.mxu0 0
  %521 = vmatpush1.bf16.msra.mxu0 %v499
  %522 = vmatprep.subr.bf16.mxu0 0
  %523 = vmatpush1.bf16.msra.mxu0 %v500
  %524 = vmatprep.subr.bf16.mxu0 0
  %525 = vmatpush1.bf16.msra.mxu0 %v501
  %526 = vmatprep.subr.bf16.mxu0 0
  %527 = vmatpush1.bf16.msra.mxu0 0
  %528 = vmatprep.subr.bf16.mxu0 0
  %529 = vmatpush1.bf16.msra.mxu0 0
  %530 = vmatprep.subr.bf16.mxu0 0
  %531 = vmatpush1.bf16.msra.mxu0 0
  %532 = vmatprep.subr.bf16.mxu0 0
  %533 = vmatpush1.bf16.msra.mxu0 0
  %534 = vmatprep.subr.bf16.mxu0 0
  %535 = vmatpush1.bf16.msra.mxu0 0
  %536 = vmatprep.subr.bf16.mxu0 0
  %537 = vmatpush1.bf16.msra.mxu0 0
  %538 = vmatprep.subr.bf16.mxu0 0
  %539 = vmatpush1.bf16.msra.mxu0 0
  %540 = vmatprep.subr.bf16.mxu0 0
  %541 = vmatpush1.bf16.msra.mxu0 0
  %542 = vmatprep.mubr.bf16.mxu0 0
  %543 = vmatmul.mubr.bf16.gmra.mrb[0].mxu0 %v443
  %v544 = vpop.f32.mrb[0].mxu0
  %v545 = vadd.f32 0.0, %v544
  %v546 = vpop.f32.mrb[0].mxu0
  %v547 = vpop.f32.mrb[0].mxu0
  %v548 = vadd.f32 0.0, %v547
  %v549 = vpop.f32.mrb[0].mxu0
  %550 = vmatprep.mubr.bf16.mxu0 0
  %551 = vmatmul.mubr.bf16.gmra.mrb[0].mxu0 %v444
  %v552 = vpop.f32.mrb[0].mxu0
  %v553 = vadd.f32 0.0, %v552
  %v554 = vpop.f32.mrb[0].mxu0
  %v555 = vpop.f32.mrb[0].mxu0
  %v556 = vadd.f32 0.0, %v555
  %v557 = vpop.f32.mrb[0].mxu0
  %558 = vmatprep.mubr.bf16.mxu0 0
  %559 = vmatmul.mubr.bf16.gmra.mrb[0].mxu0 %v445
  %v560 = vpop.f32.mrb[0].mxu0
  %v561 = vadd.f32 0.0, %v560
  %v562 = vpop.f32.mrb[0].mxu0
  %v563 = vpop.f32.mrb[0].mxu0
  %v564 = vpop.f32.mrb[0].mxu0
  %565 = vdwg.mxu0
  %v582 = vunpack.c.l.b16 %v422
  %v583 = vunpack.c.l.b16 %v423
  %v584 = vunpack.c.l.b16 %v424
  %v585 = vunpack.c.l.b16 %v425
  %v586 = vunpack.c.l.b16 %v426
  %v587 = vunpack.c.l.b16 %v427
  %v588 = vunpack.c.l.b16 %v428
  %v589 = vunpack.c.l.b16 %v429
  %v590 = vunpack.c.l.b16 %v430
  %v591 = vunpack.c.l.b16 %v431
  %v592 = vunpack.c.l.b16 %v432
  %v593 = vunpack.c.l.b16 %v433
  %v594 = vunpack.c.l.b16 %v434
  %v595 = vunpack.c.l.b16 %v435
  %v596 = vunpack.c.l.b16 %v436
  %v597 = vunpack.c.l.b16 %v437
  %v598 = vpack.c.b16 %v583, %v582
  %v599 = vpack.c.b16 %v585, %v584
  %v600 = vpack.c.b16 %v587, %v586
  %v601 = vpack.c.b16 %v589, %v588
  %v602 = vpack.c.b16 %v591, %v590
  %v603 = vpack.c.b16 %v593, %v592
  %v604 = vpack.c.b16 %v595, %v594
  %v605 = vpack.c.b16 %v597, %v596
  %614 = vmatprep.subr.bf16.mxu0 0
  %615 = vmatpush1.bf16.msra.mxu0 %v598
  %616 = vmatprep.subr.bf16.mxu0 0
  %617 = vmatpush1.bf16.msra.mxu0 %v599
  %618 = vmatprep.subr.bf16.mxu0 0
  %619 = vmatpush1.bf16.msra.mxu0 %v600
  %620 = vmatprep.subr.bf16.mxu0 0
  %621 = vmatpush1.bf16.msra.mxu0 %v601
  %622 = vmatprep.subr.bf16.mxu0 0
  %623 = vmatpush1.bf16.msra.mxu0 %v602
  %624 = vmatprep.subr.bf16.mxu0 0
  %625 = vmatpush1.bf16.msra.mxu0 %v603
  %626 = vmatprep.subr.bf16.mxu0 0
  %627 = vmatpush1.bf16.msra.mxu0 %v604
  %628 = vmatprep.subr.bf16.mxu0 0
  %629 = vmatpush1.bf16.msra.mxu0 %v605
  %630 = vmatprep.subr.bf16.mxu0 0
  %631 = vmatpush1.bf16.msra.mxu0 0
  %632 = vmatprep.subr.bf16.mxu0 0
  %633 = vmatpush1.bf16.msra.mxu0 0
  %634 = vmatprep.subr.bf16.mxu0 0
  %635 = vmatpush1.bf16.msra.mxu0 0
  %636 = vmatprep.subr.bf16.mxu0 0
  %637 = vmatpush1.bf16.msra.mxu0 0
  %638 = vmatprep.subr.bf16.mxu0 0
  %639 = vmatpush1.bf16.msra.mxu0 0
  %640 = vmatprep.subr.bf16.mxu0 0
  %641 = vmatpush1.bf16.msra.mxu0 0
  %642 = vmatprep.subr.bf16.mxu0 0
  %643 = vmatpush1.bf16.msra.mxu0 0
  %644 = vmatprep.subr.bf16.mxu0 0
  %645 = vmatpush1.bf16.msra.mxu0 0
  %646 = vmatprep.mubr.bf16.mxu0 0
  %647 = vmatmul.mubr.bf16.gmra.mrb[0].mxu0 %v418
  %v648 = vpop.f32.mrb[0].mxu0
  %v649 = vadd.f32 %v545, %v648
  %v650 = vpop.f32.mrb[0].mxu0
  %v651 = vpop.f32.mrb[0].mxu0
  %v652 = vadd.f32 %v548, %v651
  %v653 = vpop.f32.mrb[0].mxu0
  %654 = vmatprep.mubr.bf16.mxu0 0
  %655 = vmatmul.mubr.bf16.gmra.mrb[0].mxu0 %v419
  %v656 = vpop.f32.mrb[0].mxu0
  %v657 = vadd.f32 %v553, %v656
  %v658 = vpop.f32.mrb[0].mxu0
  %v659 = vpop.f32.mrb[0].mxu0
  %v660 = vadd.f32 %v556, %v659
  %v661 = vpop.f32.mrb[0].mxu0
  %662 = vmatprep.mubr.bf16.mxu0 0
  %663 = vmatmul.mubr.bf16.gmra.mrb[0].mxu0 %v420
  %v664 = vpop.f32.mrb[0].mxu0
  %v665 = vadd.f32 %v561, %v664
  %v666 = vpop.f32.mrb[0].mxu0
  %v667 = vpop.f32.mrb[0].mxu0
  %v668 = vpop.f32.mrb[0].mxu0
  %669 = vdwg.mxu0
  %v670 = vld [vmem:[#allocation2 + $0x2] sm:$0xff]
  %v671 = vld [vmem:[#allocation2 + $0xa] sm:$0xff]
  %v672 = vld [vmem:[#allocation2 + $0x12] sm:$0xff]
  %v673 = vld [vmem:[#allocation2 + $0x1a] sm:$0xff]
  %v674 = vld [vmem:[#allocation2 + $0x22] sm:$0x3]
  %v675 = vpack.c.bf16 %v671, %v670
  %v676 = vpack.c.bf16 %v673, %v672
  %v677 = vpack.c.bf16 %v674, %v674
  %s678 = scalar_lea.vmem %s4, 128
  %v679 = vld [vmem:[%s678] sm:$0xf]
  %v680 = vld [vmem:[%s678 + $0x4] sm:$0xf]
  %v681 = vld [vmem:[%s678 + $0x8] sm:$0xf]
  %v682 = vld [vmem:[%s678 + $0xc] sm:$0xf]
  %v683 = vld [vmem:[%s678 + $0x10] sm:$0xf]
  %v684 = vld [vmem:[%s678 + $0x14] sm:$0xf]
  %v685 = vld [vmem:[%s678 + $0x18] sm:$0xf]
  %v686 = vld [vmem:[%s678 + $0x1c] sm:$0xf]
  %v687 = vld [vmem:[%s678 + $0x20] sm:$0xf]
  %v688 = vld [vmem:[%s678 + $0x24] sm:$0xf]
  %v689 = vld [vmem:[%s678 + $0x28] sm:$0xf]
  %v690 = vld [vmem:[%s678 + $0x2c] sm:$0xf]
  %v691 = vld [vmem:[%s678 + $0x30] sm:$0xf]
  %v692 = vld [vmem:[%s678 + $0x34] sm:$0xf]
  %v693 = vld [vmem:[%s678 + $0x38] sm:$0xf]
  %v694 = vld [vmem:[%s678 + $0x3c] sm:$0xf]
  %v711 = vunpack.c.l.b16 %v679
  %v712 = vunpack.c.l.b16 %v680
  %v713 = vunpack.c.l.b16 %v681
  %v714 = vunpack.c.l.b16 %v682
  %v715 = vunpack.c.l.b16 %v683
  %v716 = vunpack.c.l.b16 %v684
  %v717 = vunpack.c.l.b16 %v685
  %v718 = vunpack.c.l.b16 %v686
  %v719 = vunpack.c.l.b16 %v687
  %v720 = vunpack.c.l.b16 %v688
  %v721 = vunpack.c.l.b16 %v689
  %v722 = vunpack.c.l.b16 %v690
  %v723 = vunpack.c.l.b16 %v691
  %v724 = vunpack.c.l.b16 %v692
  %v725 = vunpack.c.l.b16 %v693
  %v726 = vunpack.c.l.b16 %v694
  %v727 = vpack.c.b16 %v712, %v711
  %v728 = vpack.c.b16 %v714, %v713
  %v729 = vpack.c.b16 %v716, %v715
  %v730 = vpack.c.b16 %v718, %v717
  %v731 = vpack.c.b16 %v720, %v719
  %v732 = vpack.c.b16 %v722, %v721
  %v733 = vpack.c.b16 %v724, %v723
  %v734 = vpack.c.b16 %v726, %v725
  %743 = vmatprep.subr.bf16.mxu0 0
  %744 = vmatpush1.bf16.msra.mxu0 %v727
  %745 = vmatprep.subr.bf16.mxu0 0
  %746 = vmatpush1.bf16.msra.mxu0 %v728
  %747 = vmatprep.subr.bf16.mxu0 0
  %748 = vmatpush1.bf16.msra.mxu0 %v729
  %749 = vmatprep.subr.bf16.mxu0 0
  %750 = vmatpush1.bf16.msra.mxu0 %v730
  %751 = vmatprep.subr.bf16.mxu0 0
  %752 = vmatpush1.bf16.msra.mxu0 %v731
  %753 = vmatprep.subr.bf16.mxu0 0
  %754 = vmatpush1.bf16.msra.mxu0 %v732
  %755 = vmatprep.subr.bf16.mxu0 0
  %756 = vmatpush1.bf16.msra.mxu0 %v733
  %757 = vmatprep.subr.bf16.mxu0 0
  %758 = vmatpush1.bf16.msra.mxu0 %v734
  %759 = vmatprep.subr.bf16.mxu0 0
  %760 = vmatpush1.bf16.msra.mxu0 0
  %761 = vmatprep.subr.bf16.mxu0 0
  %762 = vmatpush1.bf16.msra.mxu0 0
  %763 = vmatprep.subr.bf16.mxu0 0
  %764 = vmatpush1.bf16.msra.mxu0 0
  %765 = vmatprep.subr.bf16.mxu0 0
  %766 = vmatpush1.bf16.msra.mxu0 0
  %767 = vmatprep.subr.bf16.mxu0 0
  %768 = vmatpush1.bf16.msra.mxu0 0
  %769 = vmatprep.subr.bf16.mxu0 0
  %770 = vmatpush1.bf16.msra.mxu0 0
  %771 = vmatprep.subr.bf16.mxu0 0
  %772 = vmatpush1.bf16.msra.mxu0 0
  %773 = vmatprep.subr.bf16.mxu0 0
  %774 = vmatpush1.bf16.msra.mxu0 0
  %775 = vmatprep.mubr.bf16.mxu0 0
  %776 = vmatmul.mubr.bf16.gmra.mrb[0].mxu0 %v675
  %v777 = vpop.f32.mrb[0].mxu0
  %v778 = vadd.f32 0.0, %v777
  %v779 = vpop.f32.mrb[0].mxu0
  %v780 = vpop.f32.mrb[0].mxu0
  %v781 = vadd.f32 0.0, %v780
  %v782 = vpop.f32.mrb[0].mxu0
  %783 = vmatprep.mubr.bf16.mxu0 0
  %784 = vmatmul.mubr.bf16.gmra.mrb[0].mxu0 %v676
  %v785 = vpop.f32.mrb[0].mxu0
  %v786 = vadd.f32 0.0, %v785
  %v787 = vpop.f32.mrb[0].mxu0
  %v788 = vpop.f32.mrb[0].mxu0
  %v789 = vadd.f32 0.0, %v788
  %v790 = vpop.f32.mrb[0].mxu0
  %791 = vmatprep.mubr.bf16.mxu0 0
  %792 = vmatmul.mubr.bf16.gmra.mrb[0].mxu0 %v677
  %v793 = vpop.f32.mrb[0].mxu0
  %v794 = vadd.f32 0.0, %v793
  %v795 = vpop.f32.mrb[0].mxu0
  %v796 = vpop.f32.mrb[0].mxu0
  %v797 = vpop.f32.mrb[0].mxu0
  %798 = vdwg.mxu0
  %v799 = vadd.f32 %v649, %v778
  %v800 = vadd.f32 %v652, %v781
  %v801 = vadd.f32 %v657, %v786
  %v802 = vadd.f32 %v660, %v789
  %v803 = vadd.f32 %v665, %v794
  %v804 = vld [vmem:[%s5] sm:$0x1]
  %v806 = vlaneseq
  %v807 = vshrl.u32 %v806, 7
  %v808 = vsub.s32 0, %v807
  %v809 = vrot.slane %v804, %v808
  %v811 = vadd.f32 %v799, %v809
  %v812 = vadd.f32 %v800, %v809
  %v813 = vadd.f32 %v801, %v809
  %v814 = vadd.f32 %v802, %v809
  %v815 = vadd.f32 %v803, %v809
  %v816 = vadd.f32 %v811, %v161
  %v817 = vadd.f32 %v812, %v165
  %v818 = vadd.f32 %v813, %v171
  %v819 = vadd.f32 %v814, %v175
  %v820 = vadd.f32 %v815, %v181
  %v821 = vmax.f32 %v816, 0.0
  %v822 = vmax.f32 %v817, 0.0
  %v823 = vmax.f32 %v818, 0.0
  %v824 = vmax.f32 %v819, 0.0
  %v825 = vmax.f32 %v820, 0.0
  %826 = vst [vmem:[%s6] sm:$0xff] %v821
  %827 = vst [vmem:[%s6 + $0x8] sm:$0xff] %v822
  %s828 = scalar_lea.vmem %s6, 16
  %829 = vst [vmem:[%s828 - $0x2] sm:$0xfc] %v823
  %830 = vst [vmem:[%s828 + $0x6] sm:$0xff] %v824
  %831 = vst [vmem:[%s828 + $0xe] sm:$0x3] %v825
  // Predicated region
  $region26: #{basic_block.1} parent=0 // pred_check
    _
  $region27: #{basic_block.1} parent=0 // pred_check_branch
    %833 = sbr.rel (0) target = $region29
  $region28: #{basic_block.1} parent=0 // pred_region
    _
  $region29: #{basic_block.1} parent=0 // pred_fallthru
    _
  // Predicated region
  $region30: #{basic_block.1} parent=0 // pred_check
    _
  $region31: #{basic_block.1} parent=0 // pred_check_branch
    %835 = sbr.rel (0) target = $region33
  $region32: #{basic_block.1} parent=0 // pred_region
    _
  $region33: #{basic_block.1} parent=0 // pred_fallthru
    _

</llo_original>
